<compile_context>
chip_gen: v6e
topology: v6e:2x2x1
jax: 0.10.0
libtpu: 0.0.40
codegen_flags: <defaults>
</compile_context>

<pallas_src>
import jax
import jax.numpy as jnp
from jax.experimental import pallas as pl
from jax.experimental.pallas import tpu as pltpu


def mlp2d_fused_kernel(x_ref, w_ref, b_ref, o_ref):
    # x: (TB, in_ch)   w: (in_ch, n_cls)   b: (1, n_cls)   o: (TB, n_cls)
    acc = jnp.dot(x_ref[...], w_ref[...], preferred_element_type=jnp.float32)
    o_ref[...] = (acc + b_ref[...].astype(jnp.float32)).astype(o_ref.dtype)


def mlp2d_forward(x, w1, b1, w2, b2, *, tb=512):
    """MLP2D forward: x (B, *) flattened to (B, in_channels) -> (B, n_classes).

    Weights are stored pre-transposed: w1 (in_ch, n_ch), w2 (n_ch, n_cls),
    i.e. the kernel computes the torch-equivalent x @ W.T + b.
    """
    B = x.shape[0]
    x2d = x.reshape(B, -1)                       # glue: view(B, -1)
    in_ch = x2d.shape[1]
    n_ch = w1.shape[1]
    n_cls = w2.shape[1]
    assert w1.shape == (in_ch, n_ch) and w2.shape == (n_ch, n_cls)

    # ---- exact algebraic fusion of the two Linear layers (no nonlinearity) ----
    # Done once per call in the wrapper; with fixed params XLA hoists/folds it.
    f32 = jnp.float32
    w_eff = jnp.dot(w1.astype(f32), w2.astype(f32),
                    preferred_element_type=f32).astype(x2d.dtype)      # (in_ch, n_cls)
    b_eff = (jnp.dot(b1.astype(f32).reshape(1, n_ch), w2.astype(f32),
                     preferred_element_type=f32)
             + b2.astype(f32).reshape(1, n_cls))                       # (1, n_cls) f32

    # ---- batch tiling ----
    # tb must be a multiple of 8 (f32 sublane) OR equal the full batch extent.
    # For small B take the full extent (always layout-legal); a partial last
    # block at large B is masked by Pallas on write-back.
    if B <= tb:
        tb = B
    grid = (pl.cdiv(B, tb),)

    itemsize = jnp.dtype(x2d.dtype).itemsize
    cost = pl.CostEstimate(
        flops=2 * B * in_ch * n_cls,
        transcendentals=0,
        bytes_accessed=(B * in_ch * itemsize           # x
                        + in_ch * n_cls * itemsize     # W_eff
                        + n_cls * 4                    # b_eff (f32)
                        + B * n_cls * itemsize),       # out
    )

    return pl.pallas_call(
        mlp2d_fused_kernel,
        out_shape=jax.ShapeDtypeStruct((B, n_cls), x2d.dtype),
        grid=grid,
        in_specs=[
            pl.BlockSpec((tb, in_ch), lambda i: (i, 0)),      # x tile (pipelined)
            pl.BlockSpec((in_ch, n_cls), lambda i: (0, 0)),   # W_eff (VMEM-resident)
            pl.BlockSpec((1, n_cls), lambda i: (0, 0)),       # b_eff (VMEM-resident)
        ],
        out_specs=pl.BlockSpec((tb, n_cls), lambda i: (i, 0)),
        compiler_params=pltpu.CompilerParams(
            dimension_semantics=("parallel",),        # shard batch tiles across TCs (v7x)
            vmem_limit_bytes=48 * 1024 * 1024,        # explicit; safe within v7x's 64 MiB
        ),
        cost_estimate=cost,
    )(x2d, w_eff, b_eff)


def init_params(key, in_channels=208, n_channels=2, n_classes=8):
    """Deterministic init mirroring nn.Linear shapes (uniform +/- 1/sqrt(fan_in))."""
    k1, k2, k3, k4 = jax.random.split(key, 4)
    lim1 = 1.0 / jnp.sqrt(in_channels)
    lim2 = 1.0 / jnp.sqrt(n_channels)
    # stored as (in, out) == torch weight transposed
    w1 = jax.random.uniform(k1, (in_channels, n_channels), jnp.float32, -lim1, lim1)
    b1 = jax.random.uniform(k2, (n_channels,), jnp.float32, -lim1, lim1)
    w2 = jax.random.uniform(k3, (n_channels, n_classes), jnp.float32, -lim2, lim2)
    b2 = jax.random.uniform(k4, (n_classes,), jnp.float32, -lim2, lim2)
    return w1, b1, w2, b2


if __name__ == "__main__":
    key = jax.random.PRNGKey(0)
    kx, kp = jax.random.split(key)

    B, C, H, W = 2, 13, 4, 4          # 13*4*4 = 208 = default in_channels
    in_channels, n_channels, n_classes = C * H * W, 2, 8

    x = jax.random.normal(kx, (B, C, H, W), jnp.float32)   # NCHW-style input
    w1, b1, w2, b2 = init_params(kp, in_channels, n_channels, n_classes)

    out = jax.block_until_ready(mlp2d_forward(x, w1, b1, w2, b2))

    # reference check (pure JAX, unfused two-Linear forward)
    x2d = x.reshape(B, -1)
    ref = (x2d @ w1 + b1) @ w2 + b2
    assert out.shape == (B, n_classes)
    assert jnp.allclose(out, ref, atol=1e-5, rtol=1e-5), \
        float(jnp.max(jnp.abs(out - ref)))

    print("KERNEL_OK")
</pallas_src>

<mosaic_0001>
module attributes {stable_mosaic.version = 11 : i64} {
  func.func @mlp2d_fused_kernel(%arg0: i32, %arg1: memref<2x208xf32, #tpu.memory_space<vmem>>, %arg2: memref<208x8xf32, #tpu.memory_space<vmem>>, %arg3: memref<1x8xf32, #tpu.memory_space<vmem>>, %arg4: memref<2x8xf32, #tpu.memory_space<vmem>>) attributes {dimension_semantics = [#tpu.dimension_semantics<parallel>], iteration_bounds = array<i64: 1>, scalar_prefetch = 0 : i64, scratch_operands = 0 : i64, tpu.core_type = #tpu.core_type<tc>, window_params = [{transform_indices = @transform_0, window_bounds = array<i64: 2, 208>}, {pipeline_mode = #tpu.pipeline_mode<synchronous>, transform_indices = @transform_1, window_bounds = array<i64: 208, 8>}, {pipeline_mode = #tpu.pipeline_mode<synchronous>, transform_indices = @transform_2, window_bounds = array<i64: 1, 8>}, {transform_indices = @transform_3, window_bounds = array<i64: 2, 8>}]} {
    %c0 = arith.constant 0 : index
    %c0_0 = arith.constant 0 : index
    %0 = vector.load %arg1[%c0, %c0_0] : memref<2x208xf32, #tpu.memory_space<vmem>>, vector<2x208xf32>
    %c0_1 = arith.constant 0 : index
    %c0_2 = arith.constant 0 : index
    %1 = vector.load %arg2[%c0_1, %c0_2] : memref<208x8xf32, #tpu.memory_space<vmem>>, vector<208x8xf32>
    %cst = arith.constant dense<0.000000e+00> : vector<2x8xf32>
    %2 = tpu.matmul %0, %1, %cst {dimension_numbers = #tpu.dot_dimension_numbers<[1], [0], [0], [1], [0, 0, 1, 1], [], []>} : vector<2x208xf32>, vector<208x8xf32>, vector<2x8xf32> -> vector<2x8xf32>
    %c0_3 = arith.constant 0 : index
    %c0_4 = arith.constant 0 : index
    %3 = vector.load %arg3[%c0_3, %c0_4] : memref<1x8xf32, #tpu.memory_space<vmem>>, vector<1x8xf32>
    %4 = vector.broadcast %3 : vector<1x8xf32> to vector<2x8xf32>
    %5 = arith.addf %2, %4 : vector<2x8xf32>
    %c0_5 = arith.constant 0 : index
    %c0_6 = arith.constant 0 : index
    %6 = vector.load %arg4[%c0_5, %c0_6] : memref<2x8xf32, #tpu.memory_space<vmem>>, vector<2x8xf32>
    tpu.vector_store %arg4[%c0_5, %c0_6], %5 {strides = array<i32>} : memref<2x8xf32, #tpu.memory_space<vmem>>, vector<2x8xf32>,
    return
  }
  func.func @transform_0(%arg0: i32) -> (i32, i32) {
    %c0_i32 = arith.constant 0 : i32
    %c0_i32_0 = arith.constant 0 : i32
    return %arg0, %c0_i32 : i32, i32
  }
  func.func @transform_1(%arg0: i32) -> (i32, i32) {
    %c0_i32 = arith.constant 0 : i32
    %c0_i32_0 = arith.constant 0 : i32
    %c0_i32_1 = arith.constant 0 : i32
    return %c0_i32, %c0_i32_0 : i32, i32
  }
  func.func @transform_2(%arg0: i32) -> (i32, i32) {
    %c0_i32 = arith.constant 0 : i32
    %c0_i32_0 = arith.constant 0 : i32
    %c0_i32_1 = arith.constant 0 : i32
    return %c0_i32, %c0_i32_0 : i32, i32
  }
  func.func @transform_3(%arg0: i32) -> (i32, i32) {
    %c0_i32 = arith.constant 0 : i32
    %c0_i32_0 = arith.constant 0 : i32
    return %arg0, %c0_i32 : i32, i32
  }
}

</mosaic_0001>

<llo_original>
// kernel: tpu_custom_call.1
$region0: #{tpu_custom_call.1}
  #allocation0 [shape = 'u32[]', space=smem, size = 0x4, offset = 0x4, fixed_abs, tag = 'smem constant byte address 0x4 - core index']
  #allocation1 [shape = 'u32[144,128]{1,0:T(1,128)}', space=vmem, size = 0x12000, scoped, tag = 'internal scratch']
  %s0 = inlined_call_operand.vmem [shape: f32[2,208], index: 0, kind: input, shape index: {}]
  %s1 = inlined_call_operand.vmem [shape: f32[208,8], index: 1, kind: input, shape index: {}]
  %s2 = inlined_call_operand.vmem [shape: f32[1,8], index: 2, kind: input, shape index: {}]
  %s3 = inlined_call_operand.hbm [shape: f32[2,8], index: 3, kind: output, shape index: {}]
  %s4 = sld [smem:[#allocation0]]
  $region22: #{tpu_custom_call.1} parent=0
    _
  %s6 = ssub.s32 1, %s4
  %s7 = scalar_select 0, %s6, %s4
  $region1: #{tpu_custom_call.1} parent=0
    #allocation2 [shape = 'u8[1024]{0}', space=vmem, size = 0x400, scoped, tag = 'output window, operand 0, single buffered']
    #allocation3 [shape = 's32[1]{0}', space=sflag, size = 0x4, scoped, tag = 'scoped memory for tpu_custom_call.1']
    %8 = vsyncpa [#allocation3], 0
    // Predicated region
    $region2: #{tpu_custom_call.1} parent=1 // pred_check
      _
    $region3: #{tpu_custom_call.1} parent=1 // pred_check_branch
      %10 = sbr.rel (0) target = $region5
    $region4: #{tpu_custom_call.1} parent=1 // pred_region
      _
    $region5: #{tpu_custom_call.1} parent=1 // pred_fallthru
      _
    // Predicated region
    $region6: #{tpu_custom_call.1} parent=1 // pred_check
      _
    $region7: #{tpu_custom_call.1} parent=1 // pred_check_branch
      %12 = sbr.rel (0) target = $region9
    $region8: #{tpu_custom_call.1} parent=1 // pred_region
      _
    $region9: #{tpu_custom_call.1} parent=1 // pred_fallthru
      _
    // Predicated region
    $region10: #{tpu_custom_call.1} parent=1 // pred_check
      _
    $region11: #{tpu_custom_call.1} parent=1 // pred_check_branch
      %14 = sbr.rel (0) target = $region13
    $region12: #{tpu_custom_call.1} parent=1 // pred_region
      _
    $region13: #{tpu_custom_call.1} parent=1 // pred_fallthru
      _
    %v15 = vld [vmem:[%s0] sm:$0xf]
    %v16 = vld [vmem:[%s1] sm:$0xff]
    %v17 = vld [vmem:[%s1 + $0x8] sm:$0xff]
    %v18 = vld [vmem:[%s1 + $0x10] sm:$0xff]
    %v19 = vld [vmem:[%s1 + $0x18] sm:$0xff]
    %v20 = vld [vmem:[%s1 + $0x20] sm:$0xff]
    %v21 = vld [vmem:[%s1 + $0x28] sm:$0xff]
    %v22 = vld [vmem:[%s1 + $0x30] sm:$0xff]
    %v23 = vld [vmem:[%s1 + $0x38] sm:$0xff]
    %v24 = vld [vmem:[%s1 + $0x40] sm:$0xff]
    %v25 = vld [vmem:[%s1 + $0x48] sm:$0xff]
    %v26 = vld [vmem:[%s1 + $0x50] sm:$0xff]
    %v27 = vld [vmem:[%s1 + $0x58] sm:$0xff]
    %v28 = vld [vmem:[%s1 + $0x60] sm:$0xff]
    %v29 = vld [vmem:[%s1 + $0x68] sm:$0xff]
    %v30 = vld [vmem:[%s1 + $0x70] sm:$0xff]
    %v31 = vld [vmem:[%s1 + $0x78] sm:$0xff]
    %v32 = vld [vmem:[%s1 + $0x80] sm:$0xff]
    %v33 = vld [vmem:[%s1 + $0x88] sm:$0xff]
    %v34 = vld [vmem:[%s1 + $0x90] sm:$0xff]
    %v35 = vld [vmem:[%s1 + $0x98] sm:$0xff]
    %v36 = vld [vmem:[%s1 + $0xa0] sm:$0xff]
    %v37 = vld [vmem:[%s1 + $0xa8] sm:$0xff]
    %v38 = vld [vmem:[%s1 + $0xb0] sm:$0xff]
    %v39 = vld [vmem:[%s1 + $0xb8] sm:$0xff]
    %v40 = vld [vmem:[%s1 + $0xc0] sm:$0xff]
    %v41 = vld [vmem:[%s1 + $0xc8] sm:$0xff]
    %v42 = vld [vmem:[%s2] sm:$0x1]
    %v44 = vlaneseq
    %v45 = vshrl.u32 %v44, 7
    %v46 = vsub.s32 0, %v45
    %v47 = vrot.slane %v42, %v46
    %v51 = vunpack.c.l.s4 1983009808
    %v52 = vunpack.c.0.s8 %v51
    %v53 = vlaneseq
    %v54 = vshrl.u32 %v53, 7
    %v55 = vsub.s32 %v52, %v54
    %v56 = vrot.slane %v15, %v55
    %v57 = vcombine.high %v56, %v56
    %vm59 = vcmask 654336
    %v60 = vsel %vm59, %v57, 0
    %62 = vmatprep.subr.mxu0 0.0
    %63 = vmatpush1.msra.mxu0 %v31
    %64 = vmatprep.subr.mxu0 0.0
    %65 = vmatpush1.msra.mxu0 %v30
    %66 = vmatprep.subr.mxu0 0.0
    %67 = vmatpush1.msra.mxu0 %v29
    %68 = vmatprep.subr.mxu0 0.0
    %69 = vmatpush1.msra.mxu0 %v28
    %70 = vmatprep.subr.mxu0 0.0
    %71 = vmatpush1.msra.mxu0 %v27
    %72 = vmatprep.subr.mxu0 0.0
    %73 = vmatpush1.msra.mxu0 %v26
    %74 = vmatprep.subr.mxu0 0.0
    %75 = vmatpush1.msra.mxu0 %v25
    %76 = vmatprep.subr.mxu0 0.0
    %77 = vmatpush1.msra.mxu0 %v24
    %78 = vmatprep.subr.mxu0 0.0
    %79 = vmatpush1.msra.mxu0 %v23
    %80 = vmatprep.subr.mxu0 0.0
    %81 = vmatpush1.msra.mxu0 %v22
    %82 = vmatprep.subr.mxu0 0.0
    %83 = vmatpush1.msra.mxu0 %v21
    %84 = vmatprep.subr.mxu0 0.0
    %85 = vmatpush1.msra.mxu0 %v20
    %86 = vmatprep.subr.mxu0 0.0
    %87 = vmatpush1.msra.mxu0 %v19
    %88 = vmatprep.subr.mxu0 0.0
    %89 = vmatpush1.msra.mxu0 %v18
    %90 = vmatprep.subr.mxu0 0.0
    %91 = vmatpush1.msra.mxu0 %v17
    %92 = vmatprep.subr.mxu0 0.0
    %93 = vmatpush1.msra.mxu0 %v16
    %94 = vmatprep.subr.mxu0 0.0
    %95 = vmatpush2.msra.mxu0 0.0
    %96 = vmatprep.subr.mxu0 0.0
    %97 = vmatpush2.msra.mxu0 0.0
    %98 = vmatprep.subr.mxu0 0.0
    %99 = vmatpush2.msra.mxu0 0.0
    %100 = vmatprep.subr.mxu0 0.0
    %101 = vmatpush2.msra.mxu0 0.0
    %102 = vmatprep.subr.mxu0 0.0
    %103 = vmatpush2.msra.mxu0 0.0
    %104 = vmatprep.subr.mxu0 0.0
    %105 = vmatpush2.msra.mxu0 0.0
    %106 = vmatprep.subr.mxu0 0.0
    %107 = vmatpush2.msra.mxu0 %v41
    %108 = vmatprep.subr.mxu0 0.0
    %109 = vmatpush2.msra.mxu0 %v40
    %110 = vmatprep.subr.mxu0 0.0
    %111 = vmatpush2.msra.mxu0 %v39
    %112 = vmatprep.subr.mxu0 0.0
    %113 = vmatpush2.msra.mxu0 %v38
    %114 = vmatprep.subr.mxu0 0.0
    %115 = vmatpush2.msra.mxu0 %v37
    %116 = vmatprep.subr.mxu0 0.0
    %117 = vmatpush2.msra.mxu0 %v36
    %118 = vmatprep.subr.mxu0 0.0
    %119 = vmatpush2.msra.mxu0 %v35
    %120 = vmatprep.subr.mxu0 0.0
    %121 = vmatpush2.msra.mxu0 %v34
    %122 = vmatprep.subr.mxu0 0.0
    %123 = vmatpush2.msra.mxu0 %v33
    %124 = vmatprep.subr.mxu0 0.0
    %125 = vmatpush2.msra.mxu0 %v32
    %126 = vmatprep.mubr.f32.mxu0 %v60
    %127 = vmatmul.mubr.f32.gmra.mxu0 %v56
    %v128 = vpop.f32.mrf.mxu0
    %v129 = vadd.f32 %v47, %v128
    %v130 = vpop.f32.mrf.mxu0
    %131 = vdwg.mxu0
    %vm132 = vcmask 58368
    %133 = vst.msk [vmem:[#allocation2] sm:$0x3] %vm132, %v129
    // Predicated region
    $region14: #{tpu_custom_call.1} parent=1 // pred_check
      _
    $region15: #{tpu_custom_call.1} parent=1 // pred_check_branch
      %135 = sbr.rel (0) target = $region17
    $region16: #{tpu_custom_call.1} parent=1 // pred_region
      %s137 = ssub.s32 32, 32
      %138 = vsyncadd [#allocation3], %s137
      %s140 = sshll.u32 [#allocation2], 4
      %s141 = int_to_ptr.vmem [resolvable:$true] %s140
      %143 = dma.vmem_to_hbm [thread:$0]  %s141, 32, %s3, [#allocation3]
    $region17: #{tpu_custom_call.1} parent=1 // pred_fallthru
      _
    // Predicated region
    $region18: #{tpu_custom_call.1} parent=1 // pred_check
      _
    $region19: #{tpu_custom_call.1} parent=1 // pred_check_branch
      %145 = sbr.rel (0) target = $region21
    $region20: #{tpu_custom_call.1} parent=1 // pred_region
      %146 = dma.done [#allocation3], 32
    $region21: #{tpu_custom_call.1} parent=1 // pred_fallthru
      _
    %147 = vsyncpa [#allocation3], 1

</llo_original>
